<compile_context>
chip_gen: v6e
topology: v6e:2x2x1
jax: 0.10.0
libtpu: 0.0.40
codegen_flags: <defaults>
</compile_context>

<pallas_src>
import functools

import jax
import jax.numpy as jnp
from jax.experimental import pallas as pl
from jax.experimental.pallas import tpu as pltpu


def _round_up(x, m):
    return ((x + m - 1) // m) * m


def _mlp_kernel(layer_dims, max_in, x_ref, params_ref, out_ref):
    """Fused MLP forward on one batch tile (batch-on-lane layout).

    x_ref:      [2, T]                     features on sublanes, batch on lanes
    params_ref: [L, MAX_OUT, MAX_IN + 1]   per-layer packed (W | b), W is (out, in)
    out_ref:    [n_out, T]
    """
    x = x_ref[...]                                  # [2, T] f32

    # ---- layer 0 (K = 2): two broadcast FMAs on the VPU, MXU not needed ----
    in0, out0 = layer_dims[0]
    p0 = params_ref[0]                              # [MAX_OUT, MAX_IN + 1]
    w0 = p0[:out0, :in0]                            # [H, 2]
    b0 = p0[:out0, max_in:max_in + 1]               # [H, 1]
    h = w0[:, 0:1] * x[0:1, :] + w0[:, 1:2] * x[1:2, :] + b0
    h = jax.nn.sigmoid(h)                           # [H, T]

    # ---- hidden layers (ReLU) + final layer (identity) on the MXU ----
    nlayers = len(layer_dims)
    for li in range(1, nlayers):
        in_d, out_d = layer_dims[li]
        p = params_ref[li]                          # [MAX_OUT, MAX_IN + 1]
        w = p[:out_d, :in_d]                        # [out, in]
        b = p[:out_d, max_in:max_in + 1]            # [out, 1]
        h = jnp.dot(w, h, preferred_element_type=jnp.float32) + b
        if li < nlayers - 1:
            h = jnp.maximum(h, 0.0)

    out_ref[...] = h.astype(out_ref.dtype)


def regressor_forward(x, weights, biases, *, batch_tile=512):
    """Run RegressorModelV2 forward via a Pallas TPU kernel.

    x:       [B, 2] float32
    weights: list of (in_dim, out_dim) float32 arrays
    biases:  list of (out_dim,) float32 arrays
    returns: [B, n_gateways] float32
    """
    B, in0 = x.shape
    nlayers = len(weights)
    layer_dims = tuple((int(w.shape[0]), int(w.shape[1])) for w in weights)
    n_out = layer_dims[-1][1]
    max_in = max(d[0] for d in layer_dims)
    max_out = max(d[1] for d in layer_dims)

    # ---- pack all (tiny) parameters into one constant block -----------------
    packed = jnp.zeros((nlayers, max_out, max_in + 1), jnp.float32)
    for li, (w, b) in enumerate(zip(weights, biases)):
        in_d, out_d = w.shape
        packed = packed.at[li, :out_d, :in_d].set(w.T.astype(jnp.float32))
        packed = packed.at[li, :out_d, max_in].set(
            jnp.reshape(b, (out_d,)).astype(jnp.float32))

    # ---- batch-on-lane layout: x -> [2, B_pad], out -> [n_out, B_pad] -------
    tile = max(128, min(int(batch_tile), _round_up(B, 128)))
    tile = _round_up(tile, 128)
    B_pad = _round_up(B, tile)
    xt = jnp.zeros((in0, B_pad), jnp.float32).at[:, :B].set(
        x.T.astype(jnp.float32))

    kernel = functools.partial(_mlp_kernel, layer_dims, max_in)

    grid_spec = pltpu.PrefetchScalarGridSpec(
        num_scalar_prefetch=0,
        grid=(B_pad // tile,),
        in_specs=[
            pl.BlockSpec((in0, tile), lambda i: (0, i)),
            pl.BlockSpec((nlayers, max_out, max_in + 1), lambda i: (0, 0, 0)),
        ],
        out_specs=pl.BlockSpec((n_out, tile), lambda i: (0, i)),
    )

    out_t = pl.pallas_call(
        kernel,
        out_shape=jax.ShapeDtypeStruct((n_out, B_pad), jnp.float32),
        grid_spec=grid_spec,
        compiler_params=pltpu.CompilerParams(
            dimension_semantics=("parallel",)),
    )(xt, packed)

    return out_t[:, :B].T


def init_params(key, n_gateways, layer_size=10, num_layers=5):
    """Deterministic init mimicking torch.nn.Linear defaults:
    U(-1/sqrt(fan_in), 1/sqrt(fan_in)) for both weight and bias."""
    dims = [2] + [layer_size] * num_layers + [n_gateways]
    weights, biases = [], []
    for i in range(len(dims) - 1):
        fan_in, fan_out = dims[i], dims[i + 1]
        key, kw, kb = jax.random.split(key, 3)
        bound = 1.0 / jnp.sqrt(jnp.float32(fan_in))
        w = jax.random.uniform(kw, (fan_in, fan_out), jnp.float32,
                               minval=-bound, maxval=bound)
        b = jax.random.uniform(kb, (fan_out,), jnp.float32,
                               minval=-bound, maxval=bound)
        weights.append(w)
        biases.append(b)
    return weights, biases


def reference_forward(x, weights, biases):
    """Pure-JAX reference for correctness checking."""
    h = jax.nn.sigmoid(x @ weights[0] + biases[0])
    for w, b in zip(weights[1:-1], biases[1:-1]):
        h = jnp.maximum(h @ w + b, 0.0)
    return h @ weights[-1] + biases[-1]


if __name__ == "__main__":
    n_gateways = 3
    layer_size = 10
    num_layers = 5
    batch = 200           # deliberately ragged (not a multiple of 128)

    key = jax.random.PRNGKey(0)
    key, kx = jax.random.split(key)
    x = jax.random.normal(kx, (batch, 2), jnp.float32)

    weights, biases = init_params(key, n_gateways, layer_size, num_layers)

    # batch_tile=128 here so the small demo still exercises a 2-step grid
    # and the zero-padding path; for real workloads use the default (512+).
    out = regressor_forward(x, weights, biases, batch_tile=128)
    out = jax.block_until_ready(out)

    ref = reference_forward(x, weights, biases)
    assert out.shape == (batch, n_gateways)
    assert jnp.allclose(out, ref, atol=1e-4, rtol=1e-4), "mismatch vs reference"

    print("KERNEL_OK")
</pallas_src>

<mosaic_0001>
module attributes {stable_mosaic.version = 11 : i64} {
  func.func @_mlp_kernel(%arg0: i32, %arg1: memref<2x128xf32, #tpu.memory_space<vmem>>, %arg2: memref<6x10x11xf32, #tpu.memory_space<vmem>>, %arg3: memref<3x128xf32, #tpu.memory_space<vmem>>) attributes {dimension_semantics = [#tpu.dimension_semantics<parallel>], iteration_bounds = array<i64: 2>, scalar_prefetch = 0 : i64, scratch_operands = 0 : i64, tpu.core_type = #tpu.core_type<tc>, window_params = [{transform_indices = @transform_0, window_bounds = array<i64: 2, 128>}, {pipeline_mode = #tpu.pipeline_mode<synchronous>, transform_indices = @transform_1, window_bounds = array<i64: 6, 10, 11>}, {transform_indices = @transform_2, window_bounds = array<i64: 3, 128>}]} {
    %c0 = arith.constant 0 : index
    %c0_0 = arith.constant 0 : index
    %0 = vector.load %arg1[%c0, %c0_0] : memref<2x128xf32, #tpu.memory_space<vmem>>, vector<2x128xf32>
    %c0_1 = arith.constant 0 : index
    %c0_2 = arith.constant 0 : index
    %c0_3 = arith.constant 0 : index
    %1 = vector.load %arg2[%c0_1, %c0_2, %c0_3] : memref<6x10x11xf32, #tpu.memory_space<vmem>>, vector<1x10x11xf32>
    %2 = vector.shape_cast %1 : vector<1x10x11xf32> to vector<10x11xf32>
    %3 = vector.extract_strided_slice %2 {offsets = [0, 0], sizes = [10, 2], strides = [1, 1]} : vector<10x11xf32> to vector<10x2xf32>
    %4 = vector.extract_strided_slice %2 {offsets = [0, 10], sizes = [10, 1], strides = [1, 1]} : vector<10x11xf32> to vector<10x1xf32>
    %5 = vector.extract_strided_slice %3 {offsets = [0, 0], sizes = [10, 1], strides = [1, 1]} : vector<10x2xf32> to vector<10x1xf32>
    %6 = vector.extract_strided_slice %0 {offsets = [0, 0], sizes = [1, 128], strides = [1, 1]} : vector<2x128xf32> to vector<1x128xf32>
    %7 = vector.broadcast %5 : vector<10x1xf32> to vector<10x128xf32>
    %8 = vector.broadcast %6 : vector<1x128xf32> to vector<10x128xf32>
    %9 = arith.mulf %7, %8 : vector<10x128xf32>
    %10 = vector.extract_strided_slice %3 {offsets = [0, 1], sizes = [10, 1], strides = [1, 1]} : vector<10x2xf32> to vector<10x1xf32>
    %11 = vector.extract_strided_slice %0 {offsets = [1, 0], sizes = [1, 128], strides = [1, 1]} : vector<2x128xf32> to vector<1x128xf32>
    %12 = vector.broadcast %10 : vector<10x1xf32> to vector<10x128xf32>
    %13 = vector.broadcast %11 : vector<1x128xf32> to vector<10x128xf32>
    %14 = arith.mulf %12, %13 : vector<10x128xf32>
    %15 = arith.addf %9, %14 : vector<10x128xf32>
    %16 = vector.broadcast %4 : vector<10x1xf32> to vector<10x128xf32>
    %17 = arith.addf %15, %16 : vector<10x128xf32>
    %18 = arith.negf %17 : vector<10x128xf32>
    %19 = math.exp %18 : vector<10x128xf32>
    %cst = arith.constant 1.000000e+00 : f32
    %20 = vector.broadcast %cst : f32 to vector<10x128xf32>
    %21 = arith.addf %20, %19 : vector<10x128xf32>
    %22 = arith.divf %20, %21 : vector<10x128xf32>
    %c1 = arith.constant 1 : index
    %c0_4 = arith.constant 0 : index
    %c0_5 = arith.constant 0 : index
    %23 = vector.load %arg2[%c1, %c0_4, %c0_5] : memref<6x10x11xf32, #tpu.memory_space<vmem>>, vector<1x10x11xf32>
    %24 = vector.shape_cast %23 : vector<1x10x11xf32> to vector<10x11xf32>
    %25 = vector.extract_strided_slice %24 {offsets = [0, 0], sizes = [10, 10], strides = [1, 1]} : vector<10x11xf32> to vector<10x10xf32>
    %26 = vector.extract_strided_slice %24 {offsets = [0, 10], sizes = [10, 1], strides = [1, 1]} : vector<10x11xf32> to vector<10x1xf32>
    %cst_6 = arith.constant dense<0.000000e+00> : vector<10x128xf32>
    %27 = tpu.matmul %25, %22, %cst_6 {dimension_numbers = #tpu.dot_dimension_numbers<[1], [0], [0], [1], [0, 0, 1, 1], [], []>} : vector<10x10xf32>, vector<10x128xf32>, vector<10x128xf32> -> vector<10x128xf32>
    %28 = vector.broadcast %26 : vector<10x1xf32> to vector<10x128xf32>
    %29 = arith.addf %27, %28 : vector<10x128xf32>
    %cst_7 = arith.constant 0.000000e+00 : f32
    %30 = vector.broadcast %cst_7 : f32 to vector<10x128xf32>
    %31 = arith.maximumf %29, %30 : vector<10x128xf32>
    %c2 = arith.constant 2 : index
    %c0_8 = arith.constant 0 : index
    %c0_9 = arith.constant 0 : index
    %32 = vector.load %arg2[%c2, %c0_8, %c0_9] : memref<6x10x11xf32, #tpu.memory_space<vmem>>, vector<1x10x11xf32>
    %33 = vector.shape_cast %32 : vector<1x10x11xf32> to vector<10x11xf32>
    %34 = vector.extract_strided_slice %33 {offsets = [0, 0], sizes = [10, 10], strides = [1, 1]} : vector<10x11xf32> to vector<10x10xf32>
    %35 = vector.extract_strided_slice %33 {offsets = [0, 10], sizes = [10, 1], strides = [1, 1]} : vector<10x11xf32> to vector<10x1xf32>
    %cst_10 = arith.constant dense<0.000000e+00> : vector<10x128xf32>
    %36 = tpu.matmul %34, %31, %cst_10 {dimension_numbers = #tpu.dot_dimension_numbers<[1], [0], [0], [1], [0, 0, 1, 1], [], []>} : vector<10x10xf32>, vector<10x128xf32>, vector<10x128xf32> -> vector<10x128xf32>
    %37 = vector.broadcast %35 : vector<10x1xf32> to vector<10x128xf32>
    %38 = arith.addf %36, %37 : vector<10x128xf32>
    %cst_11 = arith.constant 0.000000e+00 : f32
    %39 = vector.broadcast %cst_11 : f32 to vector<10x128xf32>
    %40 = arith.maximumf %38, %39 : vector<10x128xf32>
    %c3 = arith.constant 3 : index
    %c0_12 = arith.constant 0 : index
    %c0_13 = arith.constant 0 : index
    %41 = vector.load %arg2[%c3, %c0_12, %c0_13] : memref<6x10x11xf32, #tpu.memory_space<vmem>>, vector<1x10x11xf32>
    %42 = vector.shape_cast %41 : vector<1x10x11xf32> to vector<10x11xf32>
    %43 = vector.extract_strided_slice %42 {offsets = [0, 0], sizes = [10, 10], strides = [1, 1]} : vector<10x11xf32> to vector<10x10xf32>
    %44 = vector.extract_strided_slice %42 {offsets = [0, 10], sizes = [10, 1], strides = [1, 1]} : vector<10x11xf32> to vector<10x1xf32>
    %cst_14 = arith.constant dense<0.000000e+00> : vector<10x128xf32>
    %45 = tpu.matmul %43, %40, %cst_14 {dimension_numbers = #tpu.dot_dimension_numbers<[1], [0], [0], [1], [0, 0, 1, 1], [], []>} : vector<10x10xf32>, vector<10x128xf32>, vector<10x128xf32> -> vector<10x128xf32>
    %46 = vector.broadcast %44 : vector<10x1xf32> to vector<10x128xf32>
    %47 = arith.addf %45, %46 : vector<10x128xf32>
    %cst_15 = arith.constant 0.000000e+00 : f32
    %48 = vector.broadcast %cst_15 : f32 to vector<10x128xf32>
    %49 = arith.maximumf %47, %48 : vector<10x128xf32>
    %c4 = arith.constant 4 : index
    %c0_16 = arith.constant 0 : index
    %c0_17 = arith.constant 0 : index
    %50 = vector.load %arg2[%c4, %c0_16, %c0_17] : memref<6x10x11xf32, #tpu.memory_space<vmem>>, vector<1x10x11xf32>
    %51 = vector.shape_cast %50 : vector<1x10x11xf32> to vector<10x11xf32>
    %52 = vector.extract_strided_slice %51 {offsets = [0, 0], sizes = [10, 10], strides = [1, 1]} : vector<10x11xf32> to vector<10x10xf32>
    %53 = vector.extract_strided_slice %51 {offsets = [0, 10], sizes = [10, 1], strides = [1, 1]} : vector<10x11xf32> to vector<10x1xf32>
    %cst_18 = arith.constant dense<0.000000e+00> : vector<10x128xf32>
    %54 = tpu.matmul %52, %49, %cst_18 {dimension_numbers = #tpu.dot_dimension_numbers<[1], [0], [0], [1], [0, 0, 1, 1], [], []>} : vector<10x10xf32>, vector<10x128xf32>, vector<10x128xf32> -> vector<10x128xf32>
    %55 = vector.broadcast %53 : vector<10x1xf32> to vector<10x128xf32>
    %56 = arith.addf %54, %55 : vector<10x128xf32>
    %cst_19 = arith.constant 0.000000e+00 : f32
    %57 = vector.broadcast %cst_19 : f32 to vector<10x128xf32>
    %58 = arith.maximumf %56, %57 : vector<10x128xf32>
    %c5 = arith.constant 5 : index
    %c0_20 = arith.constant 0 : index
    %c0_21 = arith.constant 0 : index
    %59 = vector.load %arg2[%c5, %c0_20, %c0_21] : memref<6x10x11xf32, #tpu.memory_space<vmem>>, vector<1x10x11xf32>
    %60 = vector.shape_cast %59 : vector<1x10x11xf32> to vector<10x11xf32>
    %61 = vector.extract_strided_slice %60 {offsets = [0, 0], sizes = [3, 10], strides = [1, 1]} : vector<10x11xf32> to vector<3x10xf32>
    %62 = vector.extract_strided_slice %60 {offsets = [0, 10], sizes = [3, 1], strides = [1, 1]} : vector<10x11xf32> to vector<3x1xf32>
    %cst_22 = arith.constant dense<0.000000e+00> : vector<3x128xf32>
    %63 = tpu.matmul %61, %58, %cst_22 {dimension_numbers = #tpu.dot_dimension_numbers<[1], [0], [0], [1], [0, 0, 1, 1], [], []>} : vector<3x10xf32>, vector<10x128xf32>, vector<3x128xf32> -> vector<3x128xf32>
    %64 = vector.broadcast %62 : vector<3x1xf32> to vector<3x128xf32>
    %65 = arith.addf %63, %64 : vector<3x128xf32>
    %c0_23 = arith.constant 0 : index
    %c0_24 = arith.constant 0 : index
    %66 = vector.load %arg3[%c0_23, %c0_24] : memref<3x128xf32, #tpu.memory_space<vmem>>, vector<3x128xf32>
    tpu.vector_store %arg3[%c0_23, %c0_24], %65 {strides = array<i32>} : memref<3x128xf32, #tpu.memory_space<vmem>>, vector<3x128xf32>,
    return
  }
  func.func @transform_0(%arg0: i32) -> (i32, i32) {
    %c0_i32 = arith.constant 0 : i32
    %c0_i32_0 = arith.constant 0 : i32
    return %c0_i32, %arg0 : i32, i32
  }
  func.func @transform_1(%arg0: i32) -> (i32, i32, i32) {
    %c0_i32 = arith.constant 0 : i32
    %c0_i32_0 = arith.constant 0 : i32
    %c0_i32_1 = arith.constant 0 : i32
    %c0_i32_2 = arith.constant 0 : i32
    return %c0_i32, %c0_i32_0, %c0_i32_1 : i32, i32, i32
  }
  func.func @transform_2(%arg0: i32) -> (i32, i32) {
    %c0_i32 = arith.constant 0 : i32
    %c0_i32_0 = arith.constant 0 : i32
    return %c0_i32, %arg0 : i32, i32
  }
}

</mosaic_0001>

<llo_original>
// kernel: tpu_custom_call.1
$region0: #{tpu_custom_call.1}
  #allocation0 [shape = 'u32[]', space=smem, size = 0x4, offset = 0x4, fixed_abs, tag = 'smem constant byte address 0x4 - core index']
  #allocation1 [shape = 'u32[144,128]{1,0:T(1,128)}', space=vmem, size = 0x12000, scoped, tag = 'internal scratch']
  %s0 = inlined_call_operand.vmem [shape: f32[2,256], index: 0, kind: input, shape index: {}]
  %s1 = inlined_call_operand.vmem [shape: f32[6,10,11], index: 1, kind: input, shape index: {}]
  %s2 = inlined_call_operand.hbm [shape: f32[3,256], index: 2, kind: output, shape index: {}]
  %s3 = sld [smem:[#allocation0]]
  $region41: #{tpu_custom_call.1} parent=0
    _
  %s5 = ssub.s32 1, %s3
  %s6 = scalar_select 0, %s5, %s3
  $region1: #{tpu_custom_call.1} parent=0
    #allocation2 [shape = 'u8[4096]{0}', space=vmem, size = 0x1000, scoped, tag = 'output window, operand 0']
    #allocation3 [shape = 's32[2]{0}', space=sflag, size = 0x8, scoped, tag = 'scoped memory for tpu_custom_call.1']
    %7 = vsyncpa [#allocation3], 0
    %s8 = scalar_lea.sflag [#allocation3], 1
    %9 = vsyncpa %s8, 0
    loop: start=0, step=1, limit=4
    $region2: #{tpu_custom_call.1} parent=1 // loop_pre_header
      _
    $region3: #{tpu_custom_call.1} parent=1 // loop_header
      %s11 = sphi 0, %s15
      %p12 = scmp.ge.s32.totalorder %s11, 4
      %s21 = sphi 0, %s23
      %s24 = sphi 0, %s21
      %s25 = sphi 0, %s24
      %s41 = sphi 0, %s25
      %s45 = sphi 0, %s45
      %s47 = sphi 0, %s45
      %s48 = sphi 0, %s47
      %s62 = sphi 0, %s48
      %s68 = sphi 0, %s70
      %s71 = sphi 0, %s68
      %s72 = sphi 0, %s71
      %s88 = sphi 0, %s72
    $region4: #{tpu_custom_call.1} parent=1 // loop_header_branch
      %14 = sbr.rel (%p12) target = $region8
    $region5: #{tpu_custom_call.1} parent=1 // loop_body
      %s16 = ssub.s32 %s11, 1
      %s17 = ssub.s32 %s11, 2
      %s18 = sadd.s32 %s11, 1
      %s19 = ssub.s32 %s11, %s18
      %p20 = scmp.eq.s32.totalorder %s19, 0
      %s22 = sadd.s32 %s21, 1
      %s23 = scalar_select %p20, %s21, %s22
      %p26 = pneg %p20
      %p27 = scmp.eq.s32.totalorder %s11, 1
      %p28 = por %p26, %p27
      %p29 = scmp.ne.s32.totalorder %s21, %s24
      %p30 = scmp.eq.s32.totalorder %s11, 0
      %p31 = por %p29, %p30
      %p32 = scmp.ne.s32.totalorder %s21, %s24
      %p33 = scmp.eq.s32.totalorder %s16, 1
      %p34 = por %p32, %p33
      %p35 = scmp.ne.s32.totalorder %s24, %s25
      %p36 = scmp.eq.s32.totalorder %s16, 0
      %p37 = por %p35, %p36
      %p38 = scmp.ne.s32.totalorder %s24, %s25
      %p39 = scmp.eq.s32.totalorder %s17, 1
      %p40 = por %p38, %p39
      %p42 = scmp.ne.s32.totalorder %s25, %s41
      %p43 = scmp.eq.s32.totalorder %s17, 0
      %p44 = por %p42, %p43
      %s46 = sadd.s32 %s45, 1
      %p49 = scmp.eq.s32.totalorder %s11, 1
      %p50 = scmp.ne.s32.totalorder %s45, %s47
      %p51 = scmp.eq.s32.totalorder %s11, 0
      %p52 = por %p50, %p51
      %p53 = scmp.ne.s32.totalorder %s45, %s47
      %p54 = scmp.eq.s32.totalorder %s16, 1
      %p55 = por %p53, %p54
      %p56 = scmp.ne.s32.totalorder %s47, %s48
      %p57 = scmp.eq.s32.totalorder %s16, 0
      %p58 = por %p56, %p57
      %p59 = scmp.ne.s32.totalorder %s47, %s48
      %p60 = scmp.eq.s32.totalorder %s17, 1
      %p61 = por %p59, %p60
      %p63 = scmp.ne.s32.totalorder %s48, %s62
      %p64 = scmp.eq.s32.totalorder %s17, 0
      %p65 = por %p63, %p64
      %s66 = ssub.s32 %s11, %s18
      %p67 = scmp.eq.s32.totalorder %s66, 0
      %s69 = sadd.s32 %s68, 1
      %s70 = scalar_select %p67, %s68, %s69
      %p73 = pneg %p67
      %p74 = scmp.eq.s32.totalorder %s11, 1
      %p75 = por %p73, %p74
      %p76 = scmp.ne.s32.totalorder %s68, %s71
      %p77 = scmp.eq.s32.totalorder %s11, 0
      %p78 = por %p76, %p77
      %p79 = scmp.ne.s32.totalorder %s68, %s71
      %p80 = scmp.eq.s32.totalorder %s16, 1
      %p81 = por %p79, %p80
      %p82 = scmp.ne.s32.totalorder %s71, %s72
      %p83 = scmp.eq.s32.totalorder %s16, 0
      %p84 = por %p82, %p83
      %p85 = scmp.ne.s32.totalorder %s71, %s72
      %p86 = scmp.eq.s32.totalorder %s17, 1
      %p87 = por %p85, %p86
      %p89 = scmp.ne.s32.totalorder %s72, %s88
      %p90 = scmp.eq.s32.totalorder %s17, 0
      %p91 = por %p89, %p90
      %p92 = scmp.le.s32.totalorder 1, %s11
      %p93 = scmp.lt.s32.totalorder %s11, 3
      %p94 = pnand %p92, %p93
      %p95 = pneg %p94
      // Predicated region
      $region9: #{tpu_custom_call.1} parent=5 // pred_check
        _
      $region10: #{tpu_custom_call.1} parent=5 // pred_check_branch
        %97 = sbr.rel (%p94) target = $region12
      $region11: #{tpu_custom_call.1} parent=5 // pred_region
        %s98 = ssub.s32 %s11, 1
        // Predicated region
        $region13: #{tpu_custom_call.1} parent=11 // pred_check
          %p99 = pneg %p58
        $region14: #{tpu_custom_call.1} parent=11 // pred_check_branch
          %101 = sbr.rel (%p99) target = $region16
        $region15: #{tpu_custom_call.1} parent=11 // pred_region
          _
        $region16: #{tpu_custom_call.1} parent=11 // pred_fallthru
          _
      $region12: #{tpu_custom_call.1} parent=5 // pred_fallthru
        _
      %p102 = scmp.lt.s32.totalorder %s11, 2
      // Predicated region
      $region17: #{tpu_custom_call.1} parent=5 // pred_check
        %p103 = pneg %p102
      $region18: #{tpu_custom_call.1} parent=5 // pred_check_branch
        %105 = sbr.rel (%p103) target = $region20
      $region19: #{tpu_custom_call.1} parent=5 // pred_region
        // Predicated region
        $region21: #{tpu_custom_call.1} parent=19 // pred_check
          %p106 = pneg %p31
        $region22: #{tpu_custom_call.1} parent=19 // pred_check_branch
          %108 = sbr.rel (%p106) target = $region24
        $region23: #{tpu_custom_call.1} parent=19 // pred_region
          %p109 = scmp.lt.s32.totalorder %s11, 1
          %s110 = scalar_select %p109, %s11, 1
          %s111 = smul.addr %s110, 2
          %s112 = scalar_lea.vmem %s0, %s111
        $region24: #{tpu_custom_call.1} parent=19 // pred_fallthru
          _
      $region20: #{tpu_custom_call.1} parent=5 // pred_fallthru
        _
      %p113 = scmp.le.s32.totalorder 1, %s11
      %p114 = scmp.lt.s32.totalorder %s11, 3
      %p115 = pnand %p113, %p114
      %p116 = pneg %p115
      // Predicated region
      $region25: #{tpu_custom_call.1} parent=5 // pred_check
        _
      $region26: #{tpu_custom_call.1} parent=5 // pred_check_branch
        %118 = sbr.rel (%p115) target = $region28
      $region27: #{tpu_custom_call.1} parent=5 // pred_region
        %s119 = ssub.s32 %s11, 1
        %p120 = scmp.lt.s32.totalorder %s16, 1
        %s121 = scalar_select %p120, %s16, 1
        %s122 = smul.addr %s121, 2
        %s123 = scalar_lea.vmem %s0, %s122
        %p124 = pneg %p37
        %p125 = pneg %p34
        %p126 = pneg %p58
        %p127 = pneg %p55
        %p128 = pneg %p84
        %p129 = pneg %p81
        %s130 = sand.u32 %s71, 1
        %s131 = scalar_lea.sflag [#allocation3], %s130
        %s132 = sand.u32 %s71, 1
        %s133 = smul.addr %s132, 4
        %s134 = scalar_lea.vmem [#allocation2], %s133
        %p135 = scmp.lt.s32.totalorder %s16, 1
        %s136 = scalar_select %p135, %s16, 1
        %s137 = smul.addr %s136, 2
        %s138 = scalar_lea.vmem %s0, %s137
        %v139 = vld [vmem:[%s138] sm:$0x3]
        %v140 = vld [vmem:[%s1] sm:$0xff]
        %v141 = vld [vmem:[%s1 + $0x8] sm:$0x3]
        %143 = vset.pattern.permute.xlu0 0
        %144 = vperm.xlu0 %143, %v140
        %v145 = vpop.permute.xlu0 %144
        %148 = vset.pattern.permute.xlu0 0
        %149 = vperm.xlu0 %148, %v141
        %v150 = vpop.permute.xlu0 %149
        %v152 = vlaneseq
        %v153 = vshrl.u32 %v152, 7
        %v154 = vsub.s32 0, %v153
        %v155 = vrot.slane %v139, %v154
        %v156 = vmul.f32 %v145, %v155
        %v157 = vmul.f32 %v150, %v155
        %158 = vset.pattern.permute.xlu0 1
        %159 = vperm.xlu0 %158, %v140
        %v160 = vpop.permute.xlu0 %159
        %162 = vset.pattern.permute.xlu0 1
        %163 = vperm.xlu0 %162, %v141
        %v164 = vpop.permute.xlu0 %163
        %v166 = vlaneseq
        %v167 = vshrl.u32 %v166, 7
        %v168 = vsub.s32 1, %v167
        %v169 = vrot.slane %v139, %v168
        %v170 = vmul.f32 %v160, %v169
        %v171 = vmul.f32 %v164, %v169
        %v172 = vadd.f32 %v156, %v170
        %v173 = vadd.f32 %v157, %v171
        %174 = vset.pattern.permute.xlu0 10
        %175 = vperm.xlu0 %174, %v140
        %v176 = vpop.permute.xlu0 %175
        %178 = vset.pattern.permute.xlu0 10
        %179 = vperm.xlu0 %178, %v141
        %v180 = vpop.permute.xlu0 %179
        %v182 = vadd.f32 %v172, %v176
        %v183 = vadd.f32 %v173, %v180
        %v184 = vxor.u32 %v182, 2147483648
        %v185 = vxor.u32 %v183, 2147483648
        %v186 = vmul.f32 %v184, 1.442695
        %v187 = vpow.pop %v186
        %v188 = vmul.f32 %v185, 1.442695
        %v189 = vpow.pop %v188
        %v190 = vadd.f32 %v187, 1.0
        %v191 = vadd.f32 %v189, 1.0
        %v192 = vrcp.pop %v190
        %v193 = vmul.f32 1.0, %v192
        %v194 = vrcp.pop %v191
        %v195 = vmul.f32 1.0, %v194
        %s196 = scalar_lea.vmem %s1, 16
        %v197 = vld [vmem:[%s196] sm:$0xff]
        %v198 = vld [vmem:[%s196 + $0x8] sm:$0x3]
        %200 = vset.pattern.permute.xlu0 10
        %201 = vperm.xlu0 %200, %v197
        %v202 = vpop.permute.xlu0 %201
        %205 = vset.pattern.permute.xlu0 10
        %206 = vperm.xlu0 %205, %v198
        %v207 = vpop.permute.xlu0 %206
        %vm209 = vcmask 80896
        %v210 = vsel %vm209, %v197, 0
        %v212 = vsel %vm209, %v198, 0
        %vm214 = vcmask 1041408
        %v216 = vsel %vm214, %v195, 0
        %218 = vmatprep.subr.mxu0 0.0
        %219 = vmatpush1.msra.mxu0 0.0
        %220 = vmatprep.subr.mxu0 0.0
        %221 = vmatpush1.msra.mxu0 0.0
        %222 = vmatprep.subr.mxu0 0.0
        %223 = vmatpush1.msra.mxu0 0.0
        %224 = vmatprep.subr.mxu0 0.0
        %225 = vmatpush1.msra.mxu0 0.0
        %226 = vmatprep.subr.mxu0 0.0
        %227 = vmatpush1.msra.mxu0 0.0
        %228 = vmatprep.subr.mxu0 0.0
        %229 = vmatpush1.msra.mxu0 0.0
        %230 = vmatprep.subr.mxu0 0.0
        %231 = vmatpush1.msra.mxu0 0.0
        %232 = vmatprep.subr.mxu0 0.0
        %233 = vmatpush1.msra.mxu0 0.0
        %234 = vmatprep.subr.mxu0 0.0
        %235 = vmatpush1.msra.mxu0 0.0
        %236 = vmatprep.subr.mxu0 0.0
        %237 = vmatpush1.msra.mxu0 0.0
        %238 = vmatprep.subr.mxu0 0.0
        %239 = vmatpush1.msra.mxu0 0.0
        %240 = vmatprep.subr.mxu0 0.0
        %241 = vmatpush1.msra.mxu0 0.0
        %242 = vmatprep.subr.mxu0 0.0
        %243 = vmatpush1.msra.mxu0 0.0
        %244 = vmatprep.subr.mxu0 0.0
        %245 = vmatpush1.msra.mxu0 0.0
        %246 = vmatprep.subr.mxu0 0.0
        %247 = vmatpush1.msra.mxu0 %v216
        %248 = vmatprep.subr.mxu0 0.0
        %249 = vmatpush1.msra.mxu0 %v193
        %250 = vmatprep.subr.mxu0 0.0
        %251 = vmatpush2.msra.mxu0 0.0
        %252 = vmatprep.subr.mxu0 0.0
        %253 = vmatpush2.msra.mxu0 0.0
        %254 = vmatprep.subr.mxu0 0.0
        %255 = vmatpush2.msra.mxu0 0.0
        %256 = vmatprep.subr.mxu0 0.0
        %257 = vmatpush2.msra.mxu0 0.0
        %258 = vmatprep.subr.mxu0 0.0
        %259 = vmatpush2.msra.mxu0 0.0
        %260 = vmatprep.subr.mxu0 0.0
        %261 = vmatpush2.msra.mxu0 0.0
        %262 = vmatprep.subr.mxu0 0.0
        %263 = vmatpush2.msra.mxu0 0.0
        %264 = vmatprep.subr.mxu0 0.0
        %265 = vmatpush2.msra.mxu0 0.0
        %266 = vmatprep.subr.mxu0 0.0
        %267 = vmatpush2.msra.mxu0 0.0
        %268 = vmatprep.subr.mxu0 0.0
        %269 = vmatpush2.msra.mxu0 0.0
        %270 = vmatprep.subr.mxu0 0.0
        %271 = vmatpush2.msra.mxu0 0.0
        %272 = vmatprep.subr.mxu0 0.0
        %273 = vmatpush2.msra.mxu0 0.0
        %274 = vmatprep.subr.mxu0 0.0
        %275 = vmatpush2.msra.mxu0 0.0
        %276 = vmatprep.subr.mxu0 0.0
        %277 = vmatpush2.msra.mxu0 0.0
        %278 = vmatprep.subr.mxu0 0.0
        %279 = vmatpush2.msra.mxu0 0.0
        %280 = vmatprep.subr.mxu0 0.0
        %281 = vmatpush2.msra.mxu0 0.0
        %282 = vmatprep.mubr.f32.mxu0 0.0
        %283 = vmatmul.mubr.f32.gmra.mxu0 %v210
        %v284 = vpop.f32.mrf.mxu0
        %v285 = vadd.f32 %v202, %v284
        %v286 = vpop.f32.mrf.mxu0
        %287 = vmatprep.mubr.f32.mxu0 0.0
        %288 = vmatmul.mubr.f32.gmra.mxu0 %v212
        %v289 = vpop.f32.mrf.mxu0
        %v290 = vadd.f32 %v207, %v289
        %v291 = vpop.f32.mrf.mxu0
        %292 = vdwg.mxu0
        %v293 = vmax.f32 %v285, 0.0
        %v294 = vmax.f32 %v290, 0.0
        %s295 = scalar_lea.vmem %s1, 32
        %v296 = vld [vmem:[%s295] sm:$0xff]
        %v297 = vld [vmem:[%s295 + $0x8] sm:$0x3]
        %299 = vset.pattern.permute.xlu0 10
        %300 = vperm.xlu0 %299, %v296
        %v301 = vpop.permute.xlu0 %300
        %304 = vset.pattern.permute.xlu0 10
        %305 = vperm.xlu0 %304, %v297
        %v306 = vpop.permute.xlu0 %305
        %v308 = vsel %vm209, %v296, 0
        %v310 = vsel %vm209, %v297, 0
        %v313 = vsel %vm214, %v294, 0
        %315 = vmatprep.subr.mxu0 0.0
        %316 = vmatpush1.msra.mxu0 0.0
        %317 = vmatprep.subr.mxu0 0.0
        %318 = vmatpush1.msra.mxu0 0.0
        %319 = vmatprep.subr.mxu0 0.0
        %320 = vmatpush1.msra.mxu0 0.0
        %321 = vmatprep.subr.mxu0 0.0
        %322 = vmatpush1.msra.mxu0 0.0
        %323 = vmatprep.subr.mxu0 0.0
        %324 = vmatpush1.msra.mxu0 0.0
        %325 = vmatprep.subr.mxu0 0.0
        %326 = vmatpush1.msra.mxu0 0.0
        %327 = vmatprep.subr.mxu0 0.0
        %328 = vmatpush1.msra.mxu0 0.0
        %329 = vmatprep.subr.mxu0 0.0
        %330 = vmatpush1.msra.mxu0 0.0
        %331 = vmatprep.subr.mxu0 0.0
        %332 = vmatpush1.msra.mxu0 0.0
        %333 = vmatprep.subr.mxu0 0.0
        %334 = vmatpush1.msra.mxu0 0.0
        %335 = vmatprep.subr.mxu0 0.0
        %336 = vmatpush1.msra.mxu0 0.0
        %337 = vmatprep.subr.mxu0 0.0
        %338 = vmatpush1.msra.mxu0 0.0
        %339 = vmatprep.subr.mxu0 0.0
        %340 = vmatpush1.msra.mxu0 0.0
        %341 = vmatprep.subr.mxu0 0.0
        %342 = vmatpush1.msra.mxu0 0.0
        %343 = vmatprep.subr.mxu0 0.0
        %344 = vmatpush1.msra.mxu0 %v313
        %345 = vmatprep.subr.mxu0 0.0
        %346 = vmatpush1.msra.mxu0 %v293
        %347 = vmatprep.subr.mxu0 0.0
        %348 = vmatpush2.msra.mxu0 0.0
        %349 = vmatprep.subr.mxu0 0.0
        %350 = vmatpush2.msra.mxu0 0.0
        %351 = vmatprep.subr.mxu0 0.0
        %352 = vmatpush2.msra.mxu0 0.0
        %353 = vmatprep.subr.mxu0 0.0
        %354 = vmatpush2.msra.mxu0 0.0
        %355 = vmatprep.subr.mxu0 0.0
        %356 = vmatpush2.msra.mxu0 0.0
        %357 = vmatprep.subr.mxu0 0.0
        %358 = vmatpush2.msra.mxu0 0.0
        %359 = vmatprep.subr.mxu0 0.0
        %360 = vmatpush2.msra.mxu0 0.0
        %361 = vmatprep.subr.mxu0 0.0
        %362 = vmatpush2.msra.mxu0 0.0
        %363 = vmatprep.subr.mxu0 0.0
        %364 = vmatpush2.msra.mxu0 0.0
        %365 = vmatprep.subr.mxu0 0.0
        %366 = vmatpush2.msra.mxu0 0.0
        %367 = vmatprep.subr.mxu0 0.0
        %368 = vmatpush2.msra.mxu0 0.0
        %369 = vmatprep.subr.mxu0 0.0
        %370 = vmatpush2.msra.mxu0 0.0
        %371 = vmatprep.subr.mxu0 0.0
        %372 = vmatpush2.msra.mxu0 0.0
        %373 = vmatprep.subr.mxu0 0.0
        %374 = vmatpush2.msra.mxu0 0.0
        %375 = vmatprep.subr.mxu0 0.0
        %376 = vmatpush2.msra.mxu0 0.0
        %377 = vmatprep.subr.mxu0 0.0
        %378 = vmatpush2.msra.mxu0 0.0
        %379 = vmatprep.mubr.f32.mxu0 0.0
        %380 = vmatmul.mubr.f32.gmra.mxu0 %v308
        %v381 = vpop.f32.mrf.mxu0
        %v382 = vadd.f32 %v301, %v381
        %v383 = vpop.f32.mrf.mxu0
        %384 = vmatprep.mubr.f32.mxu0 0.0
        %385 = vmatmul.mubr.f32.gmra.mxu0 %v310
        %v386 = vpop.f32.mrf.mxu0
        %v387 = vadd.f32 %v306, %v386
        %v388 = vpop.f32.mrf.mxu0
        %389 = vdwg.mxu0
        %v390 = vmax.f32 %v382, 0.0
        %v391 = vmax.f32 %v387, 0.0
        %s392 = scalar_lea.vmem %s1, 48
        %v393 = vld [vmem:[%s392] sm:$0xff]
        %v394 = vld [vmem:[%s392 + $0x8] sm:$0x3]
        %396 = vset.pattern.permute.xlu0 10
        %397 = vperm.xlu0 %396, %v393
        %v398 = vpop.permute.xlu0 %397
        %401 = vset.pattern.permute.xlu0 10
        %402 = vperm.xlu0 %401, %v394
        %v403 = vpop.permute.xlu0 %402
        %v405 = vsel %vm209, %v393, 0
        %v407 = vsel %vm209, %v394, 0
        %v410 = vsel %vm214, %v391, 0
        %412 = vmatprep.subr.mxu0 0.0
        %413 = vmatpush1.msra.mxu0 0.0
        %414 = vmatprep.subr.mxu0 0.0
        %415 = vmatpush1.msra.mxu0 0.0
        %416 = vmatprep.subr.mxu0 0.0
        %417 = vmatpush1.msra.mxu0 0.0
        %418 = vmatprep.subr.mxu0 0.0
        %419 = vmatpush1.msra.mxu0 0.0
        %420 = vmatprep.subr.mxu0 0.0
        %421 = vmatpush1.msra.mxu0 0.0
        %422 = vmatprep.subr.mxu0 0.0
        %423 = vmatpush1.msra.mxu0 0.0
        %424 = vmatprep.subr.mxu0 0.0
        %425 = vmatpush1.msra.mxu0 0.0
        %426 = vmatprep.subr.mxu0 0.0
        %427 = vmatpush1.msra.mxu0 0.0
        %428 = vmatprep.subr.mxu0 0.0
        %429 = vmatpush1.msra.mxu0 0.0
        %430 = vmatprep.subr.mxu0 0.0
        %431 = vmatpush1.msra.mxu0 0.0
        %432 = vmatprep.subr.mxu0 0.0
        %433 = vmatpush1.msra.mxu0 0.0
        %434 = vmatprep.subr.mxu0 0.0
        %435 = vmatpush1.msra.mxu0 0.0
        %436 = vmatprep.subr.mxu0 0.0
        %437 = vmatpush1.msra.mxu0 0.0
        %438 = vmatprep.subr.mxu0 0.0
        %439 = vmatpush1.msra.mxu0 0.0
        %440 = vmatprep.subr.mxu0 0.0
        %441 = vmatpush1.msra.mxu0 %v410
        %442 = vmatprep.subr.mxu0 0.0
        %443 = vmatpush1.msra.mxu0 %v390
        %444 = vmatprep.subr.mxu0 0.0
        %445 = vmatpush2.msra.mxu0 0.0
        %446 = vmatprep.subr.mxu0 0.0
        %447 = vmatpush2.msra.mxu0 0.0
        %448 = vmatprep.subr.mxu0 0.0
        %449 = vmatpush2.msra.mxu0 0.0
        %450 = vmatprep.subr.mxu0 0.0
        %451 = vmatpush2.msra.mxu0 0.0
        %452 = vmatprep.subr.mxu0 0.0
        %453 = vmatpush2.msra.mxu0 0.0
        %454 = vmatprep.subr.mxu0 0.0
        %455 = vmatpush2.msra.mxu0 0.0
        %456 = vmatprep.subr.mxu0 0.0
        %457 = vmatpush2.msra.mxu0 0.0
        %458 = vmatprep.subr.mxu0 0.0
        %459 = vmatpush2.msra.mxu0 0.0
        %460 = vmatprep.subr.mxu0 0.0
        %461 = vmatpush2.msra.mxu0 0.0
        %462 = vmatprep.subr.mxu0 0.0
        %463 = vmatpush2.msra.mxu0 0.0
        %464 = vmatprep.subr.mxu0 0.0
        %465 = vmatpush2.msra.mxu0 0.0
        %466 = vmatprep.subr.mxu0 0.0
        %467 = vmatpush2.msra.mxu0 0.0
        %468 = vmatprep.subr.mxu0 0.0
        %469 = vmatpush2.msra.mxu0 0.0
        %470 = vmatprep.subr.mxu0 0.0
        %471 = vmatpush2.msra.mxu0 0.0
        %472 = vmatprep.subr.mxu0 0.0
        %473 = vmatpush2.msra.mxu0 0.0
        %474 = vmatprep.subr.mxu0 0.0
        %475 = vmatpush2.msra.mxu0 0.0
        %476 = vmatprep.mubr.f32.mxu0 0.0
        %477 = vmatmul.mubr.f32.gmra.mxu0 %v405
        %v478 = vpop.f32.mrf.mxu0
        %v479 = vadd.f32 %v398, %v478
        %v480 = vpop.f32.mrf.mxu0
        %481 = vmatprep.mubr.f32.mxu0 0.0
        %482 = vmatmul.mubr.f32.gmra.mxu0 %v407
        %v483 = vpop.f32.mrf.mxu0
        %v484 = vadd.f32 %v403, %v483
        %v485 = vpop.f32.mrf.mxu0
        %486 = vdwg.mxu0
        %v487 = vmax.f32 %v479, 0.0
        %v488 = vmax.f32 %v484, 0.0
        %s489 = scalar_lea.vmem %s1, 64
        %v490 = vld [vmem:[%s489] sm:$0xff]
        %v491 = vld [vmem:[%s489 + $0x8] sm:$0x3]
        %493 = vset.pattern.permute.xlu0 10
        %494 = vperm.xlu0 %493, %v490
        %v495 = vpop.permute.xlu0 %494
        %498 = vset.pattern.permute.xlu0 10
        %499 = vperm.xlu0 %498, %v491
        %v500 = vpop.permute.xlu0 %499
        %v502 = vsel %vm209, %v490, 0
        %v504 = vsel %vm209, %v491, 0
        %v507 = vsel %vm214, %v488, 0
        %509 = vmatprep.subr.mxu0 0.0
        %510 = vmatpush1.msra.mxu0 0.0
        %511 = vmatprep.subr.mxu0 0.0
        %512 = vmatpush1.msra.mxu0 0.0
        %513 = vmatprep.subr.mxu0 0.0
        %514 = vmatpush1.msra.mxu0 0.0
        %515 = vmatprep.subr.mxu0 0.0
        %516 = vmatpush1.msra.mxu0 0.0
        %517 = vmatprep.subr.mxu0 0.0
        %518 = vmatpush1.msra.mxu0 0.0
        %519 = vmatprep.subr.mxu0 0.0
        %520 = vmatpush1.msra.mxu0 0.0
        %521 = vmatprep.subr.mxu0 0.0
        %522 = vmatpush1.msra.mxu0 0.0
        %523 = vmatprep.subr.mxu0 0.0
        %524 = vmatpush1.msra.mxu0 0.0
        %525 = vmatprep.subr.mxu0 0.0
        %526 = vmatpush1.msra.mxu0 0.0
        %527 = vmatprep.subr.mxu0 0.0
        %528 = vmatpush1.msra.mxu0 0.0
        %529 = vmatprep.subr.mxu0 0.0
        %530 = vmatpush1.msra.mxu0 0.0
        %531 = vmatprep.subr.mxu0 0.0
        %532 = vmatpush1.msra.mxu0 0.0
        %533 = vmatprep.subr.mxu0 0.0
        %534 = vmatpush1.msra.mxu0 0.0
        %535 = vmatprep.subr.mxu0 0.0
        %536 = vmatpush1.msra.mxu0 0.0
        %537 = vmatprep.subr.mxu0 0.0
        %538 = vmatpush1.msra.mxu0 %v507
        %539 = vmatprep.subr.mxu0 0.0
        %540 = vmatpush1.msra.mxu0 %v487
        %541 = vmatprep.subr.mxu0 0.0
        %542 = vmatpush2.msra.mxu0 0.0
        %543 = vmatprep.subr.mxu0 0.0
        %544 = vmatpush2.msra.mxu0 0.0
        %545 = vmatprep.subr.mxu0 0.0
        %546 = vmatpush2.msra.mxu0 0.0
        %547 = vmatprep.subr.mxu0 0.0
        %548 = vmatpush2.msra.mxu0 0.0
        %549 = vmatprep.subr.mxu0 0.0
        %550 = vmatpush2.msra.mxu0 0.0
        %551 = vmatprep.subr.mxu0 0.0
        %552 = vmatpush2.msra.mxu0 0.0
        %553 = vmatprep.subr.mxu0 0.0
        %554 = vmatpush2.msra.mxu0 0.0
        %555 = vmatprep.subr.mxu0 0.0
        %556 = vmatpush2.msra.mxu0 0.0
        %557 = vmatprep.subr.mxu0 0.0
        %558 = vmatpush2.msra.mxu0 0.0
        %559 = vmatprep.subr.mxu0 0.0
        %560 = vmatpush2.msra.mxu0 0.0
        %561 = vmatprep.subr.mxu0 0.0
        %562 = vmatpush2.msra.mxu0 0.0
        %563 = vmatprep.subr.mxu0 0.0
        %564 = vmatpush2.msra.mxu0 0.0
        %565 = vmatprep.subr.mxu0 0.0
        %566 = vmatpush2.msra.mxu0 0.0
        %567 = vmatprep.subr.mxu0 0.0
        %568 = vmatpush2.msra.mxu0 0.0
        %569 = vmatprep.subr.mxu0 0.0
        %570 = vmatpush2.msra.mxu0 0.0
        %571 = vmatprep.subr.mxu0 0.0
        %572 = vmatpush2.msra.mxu0 0.0
        %573 = vmatprep.mubr.f32.mxu0 0.0
        %574 = vmatmul.mubr.f32.gmra.mxu0 %v502
        %v575 = vpop.f32.mrf.mxu0
        %v576 = vadd.f32 %v495, %v575
        %v577 = vpop.f32.mrf.mxu0
        %578 = vmatprep.mubr.f32.mxu0 0.0
        %579 = vmatmul.mubr.f32.gmra.mxu0 %v504
        %v580 = vpop.f32.mrf.mxu0
        %v581 = vadd.f32 %v500, %v580
        %v582 = vpop.f32.mrf.mxu0
        %583 = vdwg.mxu0
        %v584 = vmax.f32 %v576, 0.0
        %v585 = vmax.f32 %v581, 0.0
        %s586 = scalar_lea.vmem %s1, 80
        %v587 = vld [vmem:[%s586] sm:$0xff]
        %589 = vset.pattern.permute.xlu0 10
        %590 = vperm.xlu0 %589, %v587
        %v591 = vpop.permute.xlu0 %590
        %v593 = vsel %vm209, %v587, 0
        %v596 = vsel %vm214, %v585, 0
        %598 = vmatprep.subr.mxu0 0.0
        %599 = vmatpush1.msra.mxu0 0.0
        %600 = vmatprep.subr.mxu0 0.0
        %601 = vmatpush1.msra.mxu0 0.0
        %602 = vmatprep.subr.mxu0 0.0
        %603 = vmatpush1.msra.mxu0 0.0
        %604 = vmatprep.subr.mxu0 0.0
        %605 = vmatpush1.msra.mxu0 0.0
        %606 = vmatprep.subr.mxu0 0.0
        %607 = vmatpush1.msra.mxu0 0.0
        %608 = vmatprep.subr.mxu0 0.0
        %609 = vmatpush1.msra.mxu0 0.0
        %610 = vmatprep.subr.mxu0 0.0
        %611 = vmatpush1.msra.mxu0 0.0
        %612 = vmatprep.subr.mxu0 0.0
        %613 = vmatpush1.msra.mxu0 0.0
        %614 = vmatprep.subr.mxu0 0.0
        %615 = vmatpush1.msra.mxu0 0.0
        %616 = vmatprep.subr.mxu0 0.0
        %617 = vmatpush1.msra.mxu0 0.0
        %618 = vmatprep.subr.mxu0 0.0
        %619 = vmatpush1.msra.mxu0 0.0
        %620 = vmatprep.subr.mxu0 0.0
        %621 = vmatpush1.msra.mxu0 0.0
        %622 = vmatprep.subr.mxu0 0.0
        %623 = vmatpush1.msra.mxu0 0.0
        %624 = vmatprep.subr.mxu0 0.0
        %625 = vmatpush1.msra.mxu0 0.0
        %626 = vmatprep.subr.mxu0 0.0
        %627 = vmatpush1.msra.mxu0 %v596
        %628 = vmatprep.subr.mxu0 0.0
        %629 = vmatpush1.msra.mxu0 %v584
        %630 = vmatprep.subr.mxu0 0.0
        %631 = vmatpush2.msra.mxu0 0.0
        %632 = vmatprep.subr.mxu0 0.0
        %633 = vmatpush2.msra.mxu0 0.0
        %634 = vmatprep.subr.mxu0 0.0
        %635 = vmatpush2.msra.mxu0 0.0
        %636 = vmatprep.subr.mxu0 0.0
        %637 = vmatpush2.msra.mxu0 0.0
        %638 = vmatprep.subr.mxu0 0.0
        %639 = vmatpush2.msra.mxu0 0.0
        %640 = vmatprep.subr.mxu0 0.0
        %641 = vmatpush2.msra.mxu0 0.0
        %642 = vmatprep.subr.mxu0 0.0
        %643 = vmatpush2.msra.mxu0 0.0
        %644 = vmatprep.subr.mxu0 0.0
        %645 = vmatpush2.msra.mxu0 0.0
        %646 = vmatprep.subr.mxu0 0.0
        %647 = vmatpush2.msra.mxu0 0.0
        %648 = vmatprep.subr.mxu0 0.0
        %649 = vmatpush2.msra.mxu0 0.0
        %650 = vmatprep.subr.mxu0 0.0
        %651 = vmatpush2.msra.mxu0 0.0
        %652 = vmatprep.subr.mxu0 0.0
        %653 = vmatpush2.msra.mxu0 0.0
        %654 = vmatprep.subr.mxu0 0.0
        %655 = vmatpush2.msra.mxu0 0.0
        %656 = vmatprep.subr.mxu0 0.0
        %657 = vmatpush2.msra.mxu0 0.0
        %658 = vmatprep.subr.mxu0 0.0
        %659 = vmatpush2.msra.mxu0 0.0
        %660 = vmatprep.subr.mxu0 0.0
        %661 = vmatpush2.msra.mxu0 0.0
        %662 = vmatprep.mubr.f32.mxu0 0.0
        %663 = vmatmul.mubr.f32.gmra.mxu0 %v593
        %v664 = vpop.f32.mrf.mxu0
        %v665 = vadd.f32 %v591, %v664
        %v666 = vpop.f32.mrf.mxu0
        %667 = vdwg.mxu0
        %668 = vst [vmem:[%s134] sm:$0x7] %v665
        %s669 = sand.u32 %s71, 1
        %s670 = scalar_lea.sflag [#allocation3], %s669
        %s671 = sand.u32 %s71, 1
        %s672 = smul.addr %s671, 4
        %s673 = scalar_lea.vmem [#allocation2], %s672
        // Predicated region
        $region29: #{tpu_custom_call.1} parent=27 // pred_check
          %p674 = pneg %p81
        $region30: #{tpu_custom_call.1} parent=27 // pred_check_branch
          %676 = sbr.rel (%p674) target = $region32
        $region31: #{tpu_custom_call.1} parent=27 // pred_region
          %s678 = ssub.s32 64, 64
          %679 = vsyncadd %s670, %s678
          %s680 = smul.addr %s16, 64
          %s681 = scalar_lea.hbm %s2, %s680
          %s683 = sshll.u32 %s673, 4
          %s684 = int_to_ptr.vmem [resolvable:$true] %s683
          %686 = dma.vmem_to_hbm [thread:$0]  %s684, 64, %s681, %s670
        $region32: #{tpu_custom_call.1} parent=27 // pred_fallthru
          _
      $region28: #{tpu_custom_call.1} parent=5 // pred_fallthru
        _
      %p687 = scmp.le.s32.totalorder 2, %s11
      // Predicated region
      $region33: #{tpu_custom_call.1} parent=5 // pred_check
        %p688 = pneg %p687
      $region34: #{tpu_custom_call.1} parent=5 // pred_check_branch
        %690 = sbr.rel (%p688) target = $region36
      $region35: #{tpu_custom_call.1} parent=5 // pred_region
        %s691 = ssub.s32 %s11, 2
        // Predicated region
        $region37: #{tpu_custom_call.1} parent=35 // pred_check
          %p692 = pneg %p87
        $region38: #{tpu_custom_call.1} parent=35 // pred_check_branch
          %694 = sbr.rel (%p692) target = $region40
        $region39: #{tpu_custom_call.1} parent=35 // pred_region
          %s695 = sand.u32 %s72, 1
          %s696 = scalar_lea.sflag [#allocation3], %s695
          %s697 = sand.u32 %s72, 1
          %s698 = smul.addr %s697, 4
          %s699 = scalar_lea.vmem [#allocation2], %s698
          %700 = dma.done %s696, 64
        $region40: #{tpu_custom_call.1} parent=35 // pred_fallthru
          _
      $region36: #{tpu_custom_call.1} parent=5 // pred_fallthru
        _
    $region6: #{tpu_custom_call.1} parent=1 // loop_footer
      %s15 = sadd.s32 1, %s11
    $region7: #{tpu_custom_call.1} parent=1 // loop_footer_branch
      %10 = sbr.rel target = $region3
    $region8: #{tpu_custom_call.1} parent=1 // loop_exit
      _
    %701 = vsyncpa [#allocation3], 1
    %s702 = scalar_lea.sflag [#allocation3], 1
    %703 = vsyncpa %s702, 1

</llo_original>
